<compile_context>
chip_gen: v7x
topology: tpu7x:2x2x1
jax: 0.10.0
libtpu: 0.0.40
codegen_flags: <defaults>
</compile_context>

<pallas_src>
import math
import functools

import numpy as np
import jax
import jax.numpy as jnp
from jax.experimental import pallas as pl
from jax.experimental.pallas import tpu as pltpu

_MB = 1024 * 1024


def _detect_vmem_limit():
    """~half of physical VMEM: 64 MiB on v5e/v6e, 32 MiB on v7x (conservative fallback)."""
    try:
        cap = int(pltpu.get_tpu_info().vmem_capacity_bytes)
    except Exception:
        return 32 * _MB
    return int(min(max(cap // 2, 32 * _MB), 100 * _MB))


def _detect_bf16_exp():
    """bf16 EUP exists on v6e / v7x; keep f32 exponentials on v5 and older."""
    try:
        kind = jax.devices()[0].device_kind.lower()
    except Exception:
        return False
    return not any(tag in kind for tag in ("v2", "v3", "v4", "v5"))


VMEM_LIMIT = _detect_vmem_limit()
USE_BF16_EXP = _detect_bf16_exp()


def _pick_tile(dim, target, align):
    """Largest `align`-multiple <= target that divides dim, else the full dim."""
    if dim <= target:
        return dim
    t = (target // align) * align
    while t >= align:
        if dim % t == 0:
            return t
        t -= align
    return dim


# ---------------------------------------------------------------------------
# Kernel 1: tiled matmul  y = x @ W   (W already (K, N); bf16 operands, f32 acc)
# ---------------------------------------------------------------------------
def _matmul_kernel(x_ref, w_ref, o_ref, acc_ref):
    @pl.when(pl.program_id(2) == 0)
    def _init():
        acc_ref[...] = jnp.zeros_like(acc_ref)

    acc_ref[...] += jnp.dot(x_ref[...], w_ref[...],
                            preferred_element_type=jnp.float32)

    @pl.when(pl.program_id(2) == pl.num_programs(2) - 1)
    def _fin():
        o_ref[...] = acc_ref[...].astype(o_ref.dtype)


def pallas_matmul(x, w, out_dtype, tm=512, tn=512, tk=1024):
    M, K = x.shape
    K2, N = w.shape
    assert K == K2
    bm = _pick_tile(M, tm, 8)
    bn = _pick_tile(N, tn, 128)
    bk = _pick_tile(K, tk, 128)
    grid = (M // bm, N // bn, K // bk)
    return pl.pallas_call(
        _matmul_kernel,
        out_shape=jax.ShapeDtypeStruct((M, N), out_dtype),
        grid_spec=pltpu.PrefetchScalarGridSpec(
            num_scalar_prefetch=0,
            grid=grid,
            in_specs=[pl.BlockSpec((bm, bk), lambda i, j, k: (i, k)),
                      pl.BlockSpec((bk, bn), lambda i, j, k: (k, j))],
            out_specs=pl.BlockSpec((bm, bn), lambda i, j, k: (i, j)),
            scratch_shapes=[pltpu.VMEM((bm, bn), jnp.float32)]),
        compiler_params=pltpu.CompilerParams(
            dimension_semantics=("parallel", "parallel", "arbitrary"),
            vmem_limit_bytes=VMEM_LIMIT),
    )(x, w)


# ---------------------------------------------------------------------------
# Kernel 2: RoPE(k) + in-place KV-cache update
#   (aliased outputs, double-buffered staging, DMA of only the new tokens)
# ---------------------------------------------------------------------------
def _rope_kv_cache_kernel(sp_ref, kq_ref, vq_ref, cos_ref, sin_ref,
                          ck_in, cv_in, ck_hbm, cv_hbm,
                          k_scr, v_scr, sems,
                          *, head_dim, n_kv_heads, seq_chunk, num_batches):
    del ck_in, cv_in                                  # aliased to ck_hbm / cv_hbm
    HD = head_dim
    b = pl.program_id(0)
    slot = b & 1
    sp = sp_ref[0]                                    # dynamic start position

    def k_copy(slot_, bb):
        return pltpu.make_async_copy(
            k_scr.at[slot_], ck_hbm.at[bb, :, pl.ds(sp, seq_chunk), :],
            sems.at[0, slot_])

    def v_copy(slot_, bb):
        return pltpu.make_async_copy(
            v_scr.at[slot_], cv_hbm.at[bb, :, pl.ds(sp, seq_chunk), :],
            sems.at[1, slot_])

    # Before reusing this staging slot, wait for the DMA issued 2 iterations ago.
    if num_batches > 2:
        @pl.when(b >= 2)
        def _wait_prev():
            k_copy(slot, b - 2).wait()
            v_copy(slot, b - 2).wait()

    c = cos_ref[...]                                  # (S, HD) split-half tables
    s = sin_ref[...]
    for h in range(n_kv_heads):                       # static unroll over heads
        kh = kq_ref[0, :, h * HD:(h + 1) * HD].astype(jnp.float32)     # (S, HD)
        kh = kh * c + pltpu.roll(kh, shift=HD // 2, axis=1) * s        # RoPE(k)
        k_scr[slot, h] = kh.astype(k_scr.dtype)
        v_scr[slot, h] = vq_ref[0, :, h * HD:(h + 1) * HD]

    k_copy(slot, b).start()
    v_copy(slot, b).start()

    # Drain all outstanding DMAs at the end of the grid.
    @pl.when(b == num_batches - 1)
    def _drain_cur():
        k_copy(slot, b).wait()
        v_copy(slot, b).wait()

    if num_batches >= 2:
        @pl.when(b == num_batches - 1)
        def _drain_other():
            k_copy(1 - slot, b - 1).wait()
            v_copy(1 - slot, b - 1).wait()


def pallas_rope_kv_cache_update(start_pos, qkv3, cos2, sin2, cache_k, cache_v,
                                *, n_q_heads):
    B, S, _ = qkv3.shape
    _, Hkv, _, HD = cache_k.shape
    H = n_q_heads
    k_blk_idx = H // Hkv                              # lane-block offset of K in qkv
    v_blk_idx = H // Hkv + 1                          # lane-block offset of V in qkv
    kern = functools.partial(_rope_kv_cache_kernel, head_dim=HD, n_kv_heads=Hkv,
                             seq_chunk=S, num_batches=B)
    return pl.pallas_call(
        kern,
        out_shape=(jax.ShapeDtypeStruct(cache_k.shape, cache_k.dtype),
                   jax.ShapeDtypeStruct(cache_v.shape, cache_v.dtype)),
        grid_spec=pltpu.PrefetchScalarGridSpec(
            num_scalar_prefetch=0,
            grid=(B,),
            in_specs=[pl.BlockSpec(memory_space=pltpu.MemorySpace.SMEM),   # start_pos
                      pl.BlockSpec((1, S, Hkv * HD), lambda b: (b, 0, k_blk_idx)),
                      pl.BlockSpec((1, S, Hkv * HD), lambda b: (b, 0, v_blk_idx)),
                      pl.BlockSpec((S, HD), lambda b: (0, 0)),
                      pl.BlockSpec((S, HD), lambda b: (0, 0)),
                      pl.BlockSpec(memory_space=pl.ANY),                   # cache_k
                      pl.BlockSpec(memory_space=pl.ANY)],                  # cache_v
            out_specs=(pl.BlockSpec(memory_space=pl.ANY),
                       pl.BlockSpec(memory_space=pl.ANY)),
            scratch_shapes=[pltpu.VMEM((2, Hkv, S, HD), cache_k.dtype),
                            pltpu.VMEM((2, Hkv, S, HD), cache_v.dtype),
                            pltpu.SemaphoreType.DMA((2, 2))]),
        input_output_aliases={5: 0, 6: 1},
        compiler_params=pltpu.CompilerParams(
            dimension_semantics=("arbitrary",),
            vmem_limit_bytes=VMEM_LIMIT),
    )(start_pos, qkv3, qkv3, cos2, sin2, cache_k, cache_v)


# ---------------------------------------------------------------------------
# Kernel 3: flash attention over the cache
#   grid (batch, q-tiles, kv-tiles), runtime kv_len, RoPE(q) + 1/sqrt(HD) fused
# ---------------------------------------------------------------------------
def _flash_attn_kernel(kvlen_ref, q_ref, cos_ref, sin_ref, k_ref, v_ref, o_ref,
                       q_scr, m_scr, l_scr, acc_scr,
                       *, head_dim, n_heads, kv_tile, use_bf16_exp):
    HD = head_dim
    li = pl.program_id(2)
    kv_len = kvlen_ref[0]

    @pl.when(li == 0)
    def _init():
        # RoPE(q) (cos/sin tables already carry the 1/sqrt(HD) scale).
        c = cos_ref[...]
        s = sin_ref[...]
        for h in range(n_heads):
            qh = q_ref[0, :, h * HD:(h + 1) * HD].astype(jnp.float32)   # (tq, HD)
            qh = qh * c + pltpu.roll(qh, shift=HD // 2, axis=1) * s
            q_scr[h] = qh.astype(q_scr.dtype)
        m_scr[...] = jnp.full_like(m_scr, -jnp.inf)
        l_scr[...] = jnp.zeros_like(l_scr)
        acc_scr[...] = jnp.zeros_like(acc_scr)

    # Skip tiles that are entirely past the live cache length.
    @pl.when(li * kv_tile < kv_len)
    def _compute():
        q = q_scr[...]                                 # (H, tq, HD)  bf16
        k = k_ref[0]                                   # (H, Tk, HD)  bf16
        v = v_ref[0]
        s_hqt = jnp.einsum("hqd,htd->hqt", q, k,
                           preferred_element_type=jnp.float32)          # f32
        # kv_len is a runtime scalar, so the boundary mask is applied on every live
        # tile (cheap VPU work; only the tile straddling kv_len actually needs it).
        pos = li * kv_tile + jax.lax.broadcasted_iota(jnp.int32, s_hqt.shape, 2)
        s_hqt = jnp.where(pos < kv_len, s_hqt, -1e30)

        m_prev = m_scr[...]
        m_new = jnp.maximum(m_prev, jnp.max(s_hqt, axis=-1, keepdims=True))
        alpha = jnp.exp(m_prev - m_new)
        x = s_hqt - m_new
        if use_bf16_exp:                               # v6e/v7x: bf16 EUP
            p = jnp.exp(x.astype(jnp.bfloat16))
        else:                                          # v5e and older: f32 EUP only
            p = jnp.exp(x)
        l_scr[...] = alpha * l_scr[...] + jnp.sum(p.astype(jnp.float32),
                                                  axis=-1, keepdims=True)
        acc_scr[...] = alpha * acc_scr[...] + jnp.einsum(
            "hqt,htd->hqd", p.astype(v.dtype), v,
            preferred_element_type=jnp.float32)
        m_scr[...] = m_new

    @pl.when(li == pl.num_programs(2) - 1)
    def _fin():
        inv_l = pl.reciprocal(l_scr[...], approx=True)                  # (H, tq, 1)
        for h in range(n_heads):                       # lane-dense output slab
            o_ref[0, :, h * HD:(h + 1) * HD] = (
                acc_scr[h] * inv_l[h]).astype(o_ref.dtype)


def pallas_flash_attention(qkv3, cos_q, sin_q, cache_k, cache_v, kv_len):
    B, S, _ = qkv3.shape
    _, Hkv, max_seq, HD = cache_k.shape
    H = Hkv                                            # n_rep == 1
    tq = _pick_tile(S, 256, 8)
    tkv_target = 512 if VMEM_LIMIT >= 48 * _MB else 256
    tkv = _pick_tile(max_seq, tkv_target, 128)
    n_kv = pl.cdiv(max_seq, tkv)

    def q_map(b, qi, li, kvlen):
        return (b, qi, 0)

    def rope_map(b, qi, li, kvlen):
        return (qi, 0)

    def kv_map(b, qi, li, kvlen):
        last = (kvlen[0] - 1) // tkv                   # last live kv tile
        return (b, 0, jnp.minimum(li, last), 0)        # clamp -> no DMA on dead tiles

    def o_map(b, qi, li, kvlen):
        return (b, qi, 0)

    # Deeper K/V buffering only pays off when the kv loop is long enough.
    kv_kwargs = dict(pipeline_mode=pl.Buffered(3)) if n_kv >= 3 else {}

    kern = functools.partial(_flash_attn_kernel, head_dim=HD, n_heads=H,
                             kv_tile=tkv, use_bf16_exp=USE_BF16_EXP)
    return pl.pallas_call(
        kern,
        out_shape=jax.ShapeDtypeStruct((B, S, H * HD), qkv3.dtype),
        grid_spec=pltpu.PrefetchScalarGridSpec(
            num_scalar_prefetch=1,                     # kv_len (runtime scalar)
            grid=(B, S // tq, n_kv),
            in_specs=[pl.BlockSpec((1, tq, H * HD), q_map),
                      pl.BlockSpec((tq, HD), rope_map),
                      pl.BlockSpec((tq, HD), rope_map),
                      pl.BlockSpec((1, Hkv, tkv, HD), kv_map, **kv_kwargs),
                      pl.BlockSpec((1, Hkv, tkv, HD), kv_map, **kv_kwargs)],
            out_specs=pl.BlockSpec((1, tq, H * HD), o_map),
            scratch_shapes=[pltpu.VMEM((H, tq, HD), qkv3.dtype),
                            pltpu.VMEM((H, tq, 1), jnp.float32),
                            pltpu.VMEM((H, tq, 1), jnp.float32),
                            pltpu.VMEM((H, tq, HD), jnp.float32)]),
        compiler_params=pltpu.CompilerParams(
            dimension_semantics=("parallel", "parallel", "arbitrary"),
            vmem_limit_bytes=VMEM_LIMIT),
    )(kv_len, qkv3, cos_q, sin_q, cache_k, cache_v)


# ---------------------------------------------------------------------------
# Module wrapper
# ---------------------------------------------------------------------------
class SelfAttentionPallas:
    """JAX/Pallas port of the PyTorch SelfAttention module."""

    def __init__(self, dim, n_heads, n_kv_heads, max_batch_size, max_seq_len, key):
        self.dim = dim
        self.n_q_heads = n_heads
        self.n_kv_heads = n_kv_heads
        self.n_rep = n_heads // n_kv_heads
        self.head_dim = dim // n_heads
        # TODO(synk): repeat_kv for n_rep > 1 (GQA) — the reference torch impl is
        # itself only runnable for n_rep == 1 (it calls x.unsqueeze(x)).
        assert self.n_rep == 1

        H, Hkv, HD = self.n_q_heads, self.n_kv_heads, self.head_dim
        k1, k2, k3, k4 = jax.random.split(key, 4)
        scale = 0.02
        # f32 master weights (torch Linear layout: (out_features, in_features)),
        # also used by the pure-JAX reference check.
        self.wq = scale * jax.random.normal(k1, (H * HD, dim), jnp.float32)
        self.wk = scale * jax.random.normal(k2, (Hkv * HD, dim), jnp.float32)
        self.wv = scale * jax.random.normal(k3, (Hkv * HD, dim), jnp.float32)
        self.wo = scale * jax.random.normal(k4, (dim, H * HD), jnp.float32)

        # Permute wq/wk rows so Q and K come out of the projection in split-half RoPE
        # layout ([even features | odd features] per head); the rotation then becomes
        # x*cos + roll(x, HD/2)*sin and q.k scores are unchanged (same permutation).
        perm = np.concatenate([np.arange(0, HD, 2), np.arange(1, HD, 2)])

        def _permute_rows(w, n_h):
            idx = (np.arange(n_h)[:, None] * HD + perm[None, :]).reshape(-1)
            return w[jnp.asarray(idx)]

        # Fused QKV weight, pre-transposed to (K, N) so the MXU streams a lane-dense
        # RHS directly (one HBM read of x per layer).
        wqkv = jnp.concatenate(
            [_permute_rows(self.wq, H), _permute_rows(self.wk, Hkv), self.wv], axis=0)
        self.wqkv_bf16 = jnp.asarray(wqkv.T, jnp.bfloat16)        # (dim, (H+2Hkv)*HD)
        self.wo_bf16 = jnp.asarray(self.wo.T, jnp.bfloat16)       # (H*HD, dim)

        # KV cache, head-major so attention reads (head, seq, head_dim) tiles directly.
        cache_shape = (max_batch_size, Hkv, max_seq_len, HD)
        self.cache_k = jnp.zeros(cache_shape, jnp.bfloat16)
        self.cache_v = jnp.zeros(cache_shape, jnp.bfloat16)

    def __call__(self, x, start_pos, cos, sin):
        B, S, D = x.shape
        H, Hkv, HD = self.n_q_heads, self.n_kv_heads, self.head_dim

        # --- fused QKV projection (tiled bf16 Pallas matmul) ---
        x2 = x.astype(jnp.bfloat16).reshape(B * S, D)
        qkv = pallas_matmul(x2, self.wqkv_bf16, out_dtype=jnp.bfloat16)
        qkv3 = qkv.reshape(B, S, (H + 2 * Hkv) * HD)   # lane-dense slab, free reshape

        # --- split-half RoPE tables for this chunk ---
        cos2 = jnp.concatenate([cos, cos], axis=-1).astype(jnp.float32)    # (S, HD)
        sin2 = jnp.concatenate([-sin, sin], axis=-1).astype(jnp.float32)   # (S, HD)

        # --- RoPE(k) + in-place KV-cache update (aliased, double-buffered DMA) ---
        sp = jnp.asarray([start_pos], jnp.int32)
        self.cache_k, self.cache_v = pallas_rope_kv_cache_update(
            sp, qkv3, cos2, sin2, self.cache_k, self.cache_v, n_q_heads=H)

        # --- flash attention over the cache (RoPE(q) + 1/sqrt(HD) fused in-kernel) ---
        qk_scale = 1.0 / math.sqrt(HD)
        kv_len = jnp.asarray([start_pos + S], jnp.int32)   # runtime scalar, no recompile
        out = pallas_flash_attention(qkv3, cos2 * qk_scale, sin2 * qk_scale,
                                     self.cache_k, self.cache_v, kv_len)

        # --- output projection (out is already lane-dense (B, S, H*HD)) ---
        y = pallas_matmul(out.reshape(B * S, H * HD), self.wo_bf16,
                          out_dtype=jnp.float32)
        return y.reshape(B, S, D)


# ---------------------------------------------------------------------------
# Pure-JAX reference (torch semantics, f32) for verification
# ---------------------------------------------------------------------------
def reference_forward(x, wq, wk, wv, wo, cos, sin, n_heads):
    B, S, D = x.shape
    HD = D // n_heads
    prec = jax.lax.Precision.HIGHEST
    xq = jnp.einsum("bsd,ed->bse", x, wq, precision=prec).reshape(B, S, n_heads, HD)
    xk = jnp.einsum("bsd,ed->bse", x, wk, precision=prec).reshape(B, S, n_heads, HD)
    xv = jnp.einsum("bsd,ed->bse", x, wv, precision=prec).reshape(B, S, n_heads, HD)

    def rope(t):
        tr = t.reshape(B, S, n_heads, HD // 2, 2)
        re, im = tr[..., 0], tr[..., 1]
        c = cos[None, :, None, :]
        sn = sin[None, :, None, :]
        re2 = re * c - im * sn
        im2 = re * sn + im * c
        return jnp.stack([re2, im2], axis=-1).reshape(B, S, n_heads, HD)

    xq, xk = rope(xq), rope(xk)
    q = xq.transpose(0, 2, 1, 3)
    k = xk.transpose(0, 2, 1, 3)
    v = xv.transpose(0, 2, 1, 3)
    scores = jnp.einsum("bhqd,bhkd->bhqk", q, k, precision=prec) / math.sqrt(HD)
    probs = jax.nn.softmax(scores.astype(jnp.float32), axis=-1)
    out = jnp.einsum("bhqk,bhkd->bhqd", probs, v, precision=prec)
    out = out.transpose(0, 2, 1, 3).reshape(B, S, n_heads * HD)
    return jnp.einsum("bse,de->bsd", out, wo, precision=prec)


if __name__ == "__main__":
    key = jax.random.PRNGKey(0)
    B, S, D, H = 2, 8, 256, 2          # head_dim = 128 (lane-aligned)
    HD = D // H
    max_batch, max_seq = 4, 1024       # max_seq > kv tile -> exercises tile skipping

    kx, kp = jax.random.split(key)
    x_full = jax.random.normal(kx, (B, 2 * S, D), jnp.float32)   # two chunks

    attn = SelfAttentionPallas(dim=D, n_heads=H, n_kv_heads=H,
                               max_batch_size=max_batch, max_seq_len=max_seq, key=kp)

    # rotary tables for positions [0, 2S)
    theta = 1.0 / (10000.0 ** (jnp.arange(0, HD, 2, dtype=jnp.float32) / HD))
    pos = jnp.arange(0, 2 * S, dtype=jnp.float32)
    ang = pos[:, None] * theta[None, :]                          # (2S, HD // 2)
    cos_all, sin_all = jnp.cos(ang), jnp.sin(ang)

    # --- step 1: prefill chunk [0, S) with an empty cache ---
    out1 = attn(x_full[:, :S], 0, cos_all[:S], sin_all[:S])
    out1 = jax.block_until_ready(out1)
    assert out1.shape == (B, S, D)
    ref1 = reference_forward(x_full[:, :S], attn.wq, attn.wk, attn.wv, attn.wo,
                             cos_all[:S], sin_all[:S], H)
    np.testing.assert_allclose(np.asarray(out1), np.asarray(ref1),
                               rtol=4e-2, atol=5e-3)

    # --- step 2: next chunk [S, 2S) attends to the cached chunk as well ---
    out2 = attn(x_full[:, S:], S, cos_all[S:], sin_all[S:])
    out2 = jax.block_until_ready(out2)
    ref_full = reference_forward(x_full, attn.wq, attn.wk, attn.wv, attn.wo,
                                 cos_all, sin_all, H)
    np.testing.assert_allclose(np.asarray(out2), np.asarray(ref_full[:, S:]),
                               rtol=4e-2, atol=5e-3)

    print("KERNEL_OK")
</pallas_src>

<mosaic_0001>
module attributes {stable_mosaic.version = 11 : i64} {
  func.func @_matmul_kernel(%arg0: i32, %arg1: i32, %arg2: i32, %arg3: memref<16x256xbf16, #tpu.memory_space<vmem>>, %arg4: memref<256x384xbf16, #tpu.memory_space<vmem>>, %arg5: memref<16x384xbf16, #tpu.memory_space<vmem>>, %arg6: memref<16x384xf32, #tpu.memory_space<vmem>>) attributes {dimension_semantics = [#tpu.dimension_semantics<parallel>, #tpu.dimension_semantics<parallel>, #tpu.dimension_semantics<arbitrary>], iteration_bounds = array<i64: 1, 2, 1>, scalar_prefetch = 0 : i64, scratch_operands = 1 : i64, tpu.core_type = #tpu.core_type<tc>, window_params = [{transform_indices = @transform_0, window_bounds = array<i64: 16, 256>}, {transform_indices = @transform_1, window_bounds = array<i64: 256, 384>}, {transform_indices = @transform_2, window_bounds = array<i64: 16, 384>}]} {
    %c0_i32 = arith.constant 0 : i32
    %0 = arith.cmpi eq, %arg2, %c0_i32 : i32
    %1 = arith.extui %0 : i1 to i32
    %c0_i32_0 = arith.constant 0 : i32
    %2 = arith.cmpi ne, %1, %c0_i32_0 : i32
    scf.if %2 {
      %cst_10 = arith.constant 0.000000e+00 : f32
      %12 = vector.broadcast %cst_10 : f32 to vector<16x384xf32>
      %c0_11 = arith.constant 0 : index
      %c0_12 = arith.constant 0 : index
      %13 = vector.load %arg6[%c0_11, %c0_12] : memref<16x384xf32, #tpu.memory_space<vmem>>, vector<16x384xf32>
      tpu.vector_store %arg6[%c0_11, %c0_12], %12 {strides = array<i32>} : memref<16x384xf32, #tpu.memory_space<vmem>>, vector<16x384xf32>,
    } else {
    }
    %c0 = arith.constant 0 : index
    %c0_1 = arith.constant 0 : index
    %3 = vector.load %arg6[%c0, %c0_1] : memref<16x384xf32, #tpu.memory_space<vmem>>, vector<16x384xf32>
    %c0_2 = arith.constant 0 : index
    %c0_3 = arith.constant 0 : index
    %4 = vector.load %arg3[%c0_2, %c0_3] : memref<16x256xbf16, #tpu.memory_space<vmem>>, vector<16x256xbf16>
    %c0_4 = arith.constant 0 : index
    %c0_5 = arith.constant 0 : index
    %5 = vector.load %arg4[%c0_4, %c0_5] : memref<256x384xbf16, #tpu.memory_space<vmem>>, vector<256x384xbf16>
    %cst = arith.constant dense<0.000000e+00> : vector<16x384xf32>
    %6 = tpu.matmul %4, %5, %cst {dimension_numbers = #tpu.dot_dimension_numbers<[1], [0], [0], [1], [0, 0, 1, 1], [], []>} : vector<16x256xbf16>, vector<256x384xbf16>, vector<16x384xf32> -> vector<16x384xf32>
    %7 = arith.addf %3, %6 : vector<16x384xf32>
    %c0_6 = arith.constant 0 : index
    %c0_7 = arith.constant 0 : index
    %8 = vector.load %arg6[%c0_6, %c0_7] : memref<16x384xf32, #tpu.memory_space<vmem>>, vector<16x384xf32>
    tpu.vector_store %arg6[%c0_6, %c0_7], %7 {strides = array<i32>} : memref<16x384xf32, #tpu.memory_space<vmem>>, vector<16x384xf32>,
    %c0_i32_8 = arith.constant 0 : i32
    %9 = arith.cmpi eq, %arg2, %c0_i32_8 : i32
    %10 = arith.extui %9 : i1 to i32
    %c0_i32_9 = arith.constant 0 : i32
    %11 = arith.cmpi ne, %10, %c0_i32_9 : i32
    scf.if %11 {
      %c0_10 = arith.constant 0 : index
      %c0_11 = arith.constant 0 : index
      %12 = vector.load %arg6[%c0_10, %c0_11] : memref<16x384xf32, #tpu.memory_space<vmem>>, vector<16x384xf32>
      %13 = arith.truncf %12 : vector<16x384xf32> to vector<16x384xbf16>
      %c0_12 = arith.constant 0 : index
      %c0_13 = arith.constant 0 : index
      %14 = vector.load %arg5[%c0_12, %c0_13] : memref<16x384xbf16, #tpu.memory_space<vmem>>, vector<16x384xbf16>
      tpu.vector_store %arg5[%c0_12, %c0_13], %13 {strides = array<i32>} : memref<16x384xbf16, #tpu.memory_space<vmem>>, vector<16x384xbf16>,
    } else {
    }
    return
  }
  func.func @transform_0(%arg0: i32, %arg1: i32, %arg2: i32) -> (i32, i32) {
    %c0_i32 = arith.constant 0 : i32
    return %arg0, %arg2 : i32, i32
  }
  func.func @transform_1(%arg0: i32, %arg1: i32, %arg2: i32) -> (i32, i32) {
    %c0_i32 = arith.constant 0 : i32
    return %arg2, %arg1 : i32, i32
  }
  func.func @transform_2(%arg0: i32, %arg1: i32, %arg2: i32) -> (i32, i32) {
    %c0_i32 = arith.constant 0 : i32
    return %arg0, %arg1 : i32, i32
  }
}

</mosaic_0001>

<llo_original>
// kernel: tpu_custom_call.1
$region0: #{tpu_custom_call.1}
  #allocation0 [shape = 'u32[]', space=smem, size = 0x4, offset = 0x4, fixed_abs, tag = 'smem constant byte address 0x4 - core index']
  #allocation1 [shape = 'u32[144,128]{1,0:T(1,128)}', space=vmem, size = 0x12000, scoped, tag = 'internal scratch']
  #allocation2 [shape = 'f32[16,384]{1,0:T(8,128)}', space=vmem, size = 0x6000, scoped, tag = 'scratch operand']
  %s0 = inlined_call_operand.hbm [shape: bf16[16,256], index: 0, kind: input, shape index: {}]
  %s1 = inlined_call_operand.hbm [shape: bf16[256,768], index: 1, kind: input, shape index: {}]
  %s2 = inlined_call_operand.hbm [shape: bf16[16,768], index: 2, kind: output, shape index: {}]
  %s3 = sld [smem:[#allocation0]]
  $region57: #{tpu_custom_call.1} parent=0
    _
  %s5 = ssub.s32 1, %s3
  %s6 = scalar_select 0, %s5, %s3
  $region1: #{tpu_custom_call.1} parent=0
    #allocation3 [shape = 'u8[8192]{0}', space=vmem, size = 0x2000, scoped, tag = 'input window, operand 0, single buffered']
    #allocation4 [shape = 's32[2]{0}', space=sflag, size = 0x8, scoped, tag = 'scoped memory for tpu_custom_call.1']
    #allocation5 [shape = 's32[2]{0}', space=sflag, size = 0x8, scoped, tag = 'scoped memory for tpu_custom_call.1']
    #allocation6 [shape = 'u8[393216]{0}', space=vmem, size = 0x60000, scoped, tag = 'input window, operand 1']
    #allocation7 [shape = 's32[2]{0}', space=sflag, size = 0x8, scoped, tag = 'scoped memory for tpu_custom_call.1']
    #allocation8 [shape = 'u8[24576]{0}', space=vmem, size = 0x6000, scoped, tag = 'output window, operand 0']
    %7 = vsyncpa [#allocation4], 0
    %8 = vsyncpa [#allocation7], 0
    %s9 = scalar_lea.sflag [#allocation7], 1
    %10 = vsyncpa %s9, 0
    %11 = vsyncpa [#allocation5], 0
    %s12 = scalar_lea.sflag [#allocation5], 1
    %13 = vsyncpa %s12, 0
    loop: start=0, step=1, limit=4
    $region2: #{tpu_custom_call.1} parent=1 // loop_pre_header
      _
    $region3: #{tpu_custom_call.1} parent=1 // loop_header
      %s15 = sphi 0, %s19
      %p16 = scmp.ge.s32.totalorder %s15, 4
      %s22 = sphi 0, %s41
      %s23 = sphi 0, %s37
      %s24 = sphi 0, %s33
      %s25 = sphi 0, %s22
      %s26 = sphi 0, %s23
      %s27 = sphi 0, %s24
      %s28 = sphi 0, %s25
      %s29 = sphi 0, %s26
      %s30 = sphi 0, %s27
      %s46 = sphi 0, %s48
      %s49 = sphi 0, %s46
      %s50 = sphi 0, %s49
      %s66 = sphi 0, %s50
      %s74 = sphi 0, %s76
      %s77 = sphi 0, %s74
      %s78 = sphi 0, %s77
      %s94 = sphi 0, %s78
      %s102 = sphi 0, %s104
      %s105 = sphi 0, %s102
      %s106 = sphi 0, %s105
      %s122 = sphi 0, %s106
    $region4: #{tpu_custom_call.1} parent=1 // loop_header_branch
      %18 = sbr.rel (%p16) target = $region8
    $region5: #{tpu_custom_call.1} parent=1 // loop_body
      %s20 = ssub.s32 %s15, 1
      %s21 = ssub.s32 %s15, 2
      %s31 = sadd.s32 1, %s24
      %p32 = scmp.ge.s32.totalorder %s31, 1
      %s33 = scalar_select %p32, 0, %s31
      %s34 = sadd.s32 1, %s23
      %s35 = scalar_select %p32, %s34, %s23
      %p36 = scmp.ge.s32.totalorder %s35, 2
      %s37 = scalar_select %p36, 0, %s35
      %s38 = sadd.s32 1, %s22
      %s39 = scalar_select %p36, %s38, %s22
      %p40 = scmp.ge.s32.totalorder %s39, 1
      %s41 = scalar_select %p40, 0, %s39
      %s42 = ssub.s32 %s22, %s41
      %s43 = ssub.s32 %s24, %s33
      %s44 = sor.u32 %s42, %s43
      %p45 = scmp.eq.s32.totalorder %s44, 0
      %s47 = sadd.s32 %s46, 1
      %s48 = scalar_select %p45, %s46, %s47
      %p51 = pneg %p45
      %p52 = scmp.eq.s32.totalorder %s15, 1
      %p53 = por %p51, %p52
      %p54 = scmp.ne.s32.totalorder %s46, %s49
      %p55 = scmp.eq.s32.totalorder %s15, 0
      %p56 = por %p54, %p55
      %p57 = scmp.ne.s32.totalorder %s46, %s49
      %p58 = scmp.eq.s32.totalorder %s20, 1
      %p59 = por %p57, %p58
      %p60 = scmp.ne.s32.totalorder %s49, %s50
      %p61 = scmp.eq.s32.totalorder %s20, 0
      %p62 = por %p60, %p61
      %p63 = scmp.ne.s32.totalorder %s49, %s50
      %p64 = scmp.eq.s32.totalorder %s21, 1
      %p65 = por %p63, %p64
      %p67 = scmp.ne.s32.totalorder %s50, %s66
      %p68 = scmp.eq.s32.totalorder %s21, 0
      %p69 = por %p67, %p68
      %s70 = ssub.s32 %s24, %s33
      %s71 = ssub.s32 %s23, %s37
      %s72 = sor.u32 %s70, %s71
      %p73 = scmp.eq.s32.totalorder %s72, 0
      %s75 = sadd.s32 %s74, 1
      %s76 = scalar_select %p73, %s74, %s75
      %p79 = pneg %p73
      %p80 = scmp.eq.s32.totalorder %s15, 1
      %p81 = por %p79, %p80
      %p82 = scmp.ne.s32.totalorder %s74, %s77
      %p83 = scmp.eq.s32.totalorder %s15, 0
      %p84 = por %p82, %p83
      %p85 = scmp.ne.s32.totalorder %s74, %s77
      %p86 = scmp.eq.s32.totalorder %s20, 1
      %p87 = por %p85, %p86
      %p88 = scmp.ne.s32.totalorder %s77, %s78
      %p89 = scmp.eq.s32.totalorder %s20, 0
      %p90 = por %p88, %p89
      %p91 = scmp.ne.s32.totalorder %s77, %s78
      %p92 = scmp.eq.s32.totalorder %s21, 1
      %p93 = por %p91, %p92
      %p95 = scmp.ne.s32.totalorder %s78, %s94
      %p96 = scmp.eq.s32.totalorder %s21, 0
      %p97 = por %p95, %p96
      %s98 = ssub.s32 %s22, %s41
      %s99 = ssub.s32 %s23, %s37
      %s100 = sor.u32 %s98, %s99
      %p101 = scmp.eq.s32.totalorder %s100, 0
      %s103 = sadd.s32 %s102, 1
      %s104 = scalar_select %p101, %s102, %s103
      %p107 = pneg %p101
      %p108 = scmp.eq.s32.totalorder %s15, 1
      %p109 = por %p107, %p108
      %p110 = scmp.ne.s32.totalorder %s102, %s105
      %p111 = scmp.eq.s32.totalorder %s15, 0
      %p112 = por %p110, %p111
      %p113 = scmp.ne.s32.totalorder %s102, %s105
      %p114 = scmp.eq.s32.totalorder %s20, 1
      %p115 = por %p113, %p114
      %p116 = scmp.ne.s32.totalorder %s105, %s106
      %p117 = scmp.eq.s32.totalorder %s20, 0
      %p118 = por %p116, %p117
      %p119 = scmp.ne.s32.totalorder %s105, %s106
      %p120 = scmp.eq.s32.totalorder %s21, 1
      %p121 = por %p119, %p120
      %p123 = scmp.ne.s32.totalorder %s106, %s122
      %p124 = scmp.eq.s32.totalorder %s21, 0
      %p125 = por %p123, %p124
      %p126 = scmp.le.s32.totalorder 1, %s15
      %p127 = scmp.lt.s32.totalorder %s15, 3
      %p128 = pnand %p126, %p127
      %p129 = pneg %p128
      // Predicated region
      $region9: #{tpu_custom_call.1} parent=5 // pred_check
        _
      $region10: #{tpu_custom_call.1} parent=5 // pred_check_branch
        %131 = sbr.rel (%p128) target = $region12
      $region11: #{tpu_custom_call.1} parent=5 // pred_region
        %s132 = ssub.s32 %s15, 1
        // Predicated region
        $region13: #{tpu_custom_call.1} parent=11 // pred_check
          %p133 = pneg %p62
        $region14: #{tpu_custom_call.1} parent=11 // pred_check_branch
          %135 = sbr.rel (%p133) target = $region16
        $region15: #{tpu_custom_call.1} parent=11 // pred_region
          %s136 = smul.u32 2, %s25
          %s137 = smul.u32 2, %s27
          %s139 = ssub.s32 256, 256
          %140 = vsyncadd [#allocation4], %s139
          %s141 = smul.addr %s136, 2
          %s142 = sadd.s32 %s137, %s141
          %s143 = smul.addr %s142, 64
          %s144 = scalar_lea.hbm %s0, %s143
          %s145 = sshll.u32 [#allocation3], 4
          %s146 = int_to_ptr.vmem [resolvable:$true] %s145
          %151 = dma.hbm_to_vmem [thread:$0]  %s144, 256, %s146, [#allocation4], 128, 128, 8
        $region16: #{tpu_custom_call.1} parent=11 // pred_fallthru
          _
      $region12: #{tpu_custom_call.1} parent=5 // pred_fallthru
        _
      %p152 = scmp.lt.s32.totalorder %s15, 2
      // Predicated region
      $region17: #{tpu_custom_call.1} parent=5 // pred_check
        %p153 = pneg %p152
      $region18: #{tpu_custom_call.1} parent=5 // pred_check_branch
        %155 = sbr.rel (%p153) target = $region20
      $region19: #{tpu_custom_call.1} parent=5 // pred_region
        // Predicated region
        $region21: #{tpu_custom_call.1} parent=19 // pred_check
          %p156 = pneg %p84
        $region22: #{tpu_custom_call.1} parent=19 // pred_check_branch
          %158 = sbr.rel (%p156) target = $region24
        $region23: #{tpu_custom_call.1} parent=19 // pred_region
          %s159 = sand.u32 %s74, 1
          %s160 = scalar_lea.sflag [#allocation7], %s159
          %s161 = sand.u32 %s74, 1
          %s162 = smul.addr %s161, 384
          %s163 = scalar_lea.vmem [#allocation6], %s162
          %s164 = smul.u32 32, %s24
          %s165 = smul.u32 3, %s23
          %s167 = ssub.s32 6144, 6144
          %168 = vsyncadd %s160, %s167
          %s169 = smul.addr %s164, 6
          %s170 = sadd.s32 %s165, %s169
          %s171 = smul.addr %s170, 64
          %s172 = scalar_lea.hbm %s1, %s171
          %s173 = sshll.u32 %s163, 4
          %s174 = int_to_ptr.vmem [resolvable:$true] %s173
          %179 = dma.hbm_to_vmem [thread:$0]  %s172, 6144, %s174, %s160, 384, 192, 12
        $region24: #{tpu_custom_call.1} parent=19 // pred_fallthru
          _
      $region20: #{tpu_custom_call.1} parent=5 // pred_fallthru
        _
      %p180 = scmp.le.s32.totalorder 1, %s15
      %p181 = scmp.lt.s32.totalorder %s15, 3
      %p182 = pnand %p180, %p181
      %p183 = pneg %p182
      // Predicated region
      $region25: #{tpu_custom_call.1} parent=5 // pred_check
        _
      $region26: #{tpu_custom_call.1} parent=5 // pred_check_branch
        %185 = sbr.rel (%p182) target = $region28
      $region27: #{tpu_custom_call.1} parent=5 // pred_region
        %s186 = ssub.s32 %s15, 1
        // Predicated region
        $region29: #{tpu_custom_call.1} parent=27 // pred_check
          %p187 = pneg %p62
        $region30: #{tpu_custom_call.1} parent=27 // pred_check_branch
          %189 = sbr.rel (%p187) target = $region32
        $region31: #{tpu_custom_call.1} parent=27 // pred_region
          %190 = dma.done [#allocation4], 256
        $region32: #{tpu_custom_call.1} parent=27 // pred_fallthru
          _
        %s191 = sand.u32 %s77, 1
        %s192 = scalar_lea.sflag [#allocation7], %s191
        %s193 = sand.u32 %s77, 1
        %s194 = smul.addr %s193, 384
        %s195 = scalar_lea.vmem [#allocation6], %s194
        // Predicated region
        $region33: #{tpu_custom_call.1} parent=27 // pred_check
          %p196 = pneg %p90
        $region34: #{tpu_custom_call.1} parent=27 // pred_check_branch
          %198 = sbr.rel (%p196) target = $region36
        $region35: #{tpu_custom_call.1} parent=27 // pred_region
          %199 = dma.done %s192, 6144
        $region36: #{tpu_custom_call.1} parent=27 // pred_fallthru
          _
        %p200 = pneg %p62
        %p201 = pneg %p59
        %s202 = sand.u32 %s77, 1
        %s203 = scalar_lea.sflag [#allocation7], %s202
        %s204 = sand.u32 %s77, 1
        %s205 = smul.addr %s204, 384
        %s206 = scalar_lea.vmem [#allocation6], %s205
        %p207 = pneg %p90
        %p208 = pneg %p87
        %p209 = pneg %p118
        %p210 = pneg %p115
        %s211 = sand.u32 %s105, 1
        %s212 = scalar_lea.sflag [#allocation5], %s211
        %s213 = sand.u32 %s105, 1
        %s214 = smul.addr %s213, 24
        %s215 = scalar_lea.vmem [#allocation8], %s214
        %s216 = smul.u32 2, %s25
        %s217 = smul.u32 2, %s27
        %s218 = smul.u32 32, %s27
        %s219 = smul.u32 3, %s26
        %s220 = smul.u32 2, %s25
        %s221 = smul.u32 3, %s26
        %p223 = scmp.eq.s32.totalorder %s27, 0
        // Predicated region
        $region37: #{tpu_custom_call.1} parent=27 // pred_check
          %p224 = pneg %p223
        $region38: #{tpu_custom_call.1} parent=27 // pred_check_branch
          %226 = sbr.rel (%p224) target = $region40
        $region39: #{tpu_custom_call.1} parent=27 // pred_region
          %227 = vst [vmem:[#allocation2] sm:$0xff] 0.0
          %228 = vst [vmem:[#allocation2 + $0x8] sm:$0xff] 0.0
          %229 = vst [vmem:[#allocation2 + $0x10] sm:$0xff] 0.0
          %230 = vst [vmem:[#allocation2 + $0x18] sm:$0xff] 0.0
          %231 = vst [vmem:[#allocation2 + $0x20] sm:$0xff] 0.0
          %232 = vst [vmem:[#allocation2 + $0x28] sm:$0xff] 0.0
        $region40: #{tpu_custom_call.1} parent=27 // pred_fallthru
          _
        %v233 = vld [vmem:[#allocation2] sm:$0xff]
        %v234 = vld [vmem:[#allocation2 + $0x8] sm:$0xff]
        %v235 = vld [vmem:[#allocation2 + $0x10] sm:$0xff]
        %v236 = vld [vmem:[#allocation2 + $0x18] sm:$0xff]
        %v237 = vld [vmem:[#allocation2 + $0x20] sm:$0xff]
        %v238 = vld [vmem:[#allocation2 + $0x28] sm:$0xff]
        %v239 = vld [vmem:[#allocation3] sm:$0xff]
        %v240 = vld [vmem:[#allocation3 + $0x8] sm:$0xff]
        %v241 = vld [vmem:[%s195] sm:$0xff]
        %v242 = vld [vmem:[%s195 + $0x8] sm:$0xf]
        %v243 = vld [vmem:[%s195 + $0xc] sm:$0xff]
        %v244 = vld [vmem:[%s195 + $0x14] sm:$0xf]
        %v245 = vld [vmem:[%s195 + $0x18] sm:$0xff]
        %v246 = vld [vmem:[%s195 + $0x20] sm:$0xf]
        %v247 = vld [vmem:[%s195 + $0x24] sm:$0xff]
        %v248 = vld [vmem:[%s195 + $0x2c] sm:$0xf]
        %v249 = vld [vmem:[%s195 + $0x30] sm:$0xff]
        %v250 = vld [vmem:[%s195 + $0x38] sm:$0xf]
        %v251 = vld [vmem:[%s195 + $0x3c] sm:$0xff]
        %v252 = vld [vmem:[%s195 + $0x44] sm:$0xf]
        %v253 = vld [vmem:[%s195 + $0x48] sm:$0xff]
        %v254 = vld [vmem:[%s195 + $0x50] sm:$0xf]
        %v255 = vld [vmem:[%s195 + $0x54] sm:$0xff]
        %v256 = vld [vmem:[%s195 + $0x5c] sm:$0xf]
        %v257 = vld [vmem:[%s195 + $0x60] sm:$0xff]
        %v258 = vld [vmem:[%s195 + $0x68] sm:$0xf]
        %v259 = vld [vmem:[%s195 + $0x6c] sm:$0xff]
        %v260 = vld [vmem:[%s195 + $0x74] sm:$0xf]
        %v261 = vld [vmem:[%s195 + $0x78] sm:$0xff]
        %v262 = vld [vmem:[%s195 + $0x80] sm:$0xf]
        %v263 = vld [vmem:[%s195 + $0x84] sm:$0xff]
        %v264 = vld [vmem:[%s195 + $0x8c] sm:$0xf]
        %v265 = vld [vmem:[%s195 + $0x90] sm:$0xff]
        %v266 = vld [vmem:[%s195 + $0x98] sm:$0xf]
        %v267 = vld [vmem:[%s195 + $0x9c] sm:$0xff]
        %v268 = vld [vmem:[%s195 + $0xa4] sm:$0xf]
        %v269 = vld [vmem:[%s195 + $0xa8] sm:$0xff]
        %v270 = vld [vmem:[%s195 + $0xb0] sm:$0xf]
        %v271 = vld [vmem:[%s195 + $0xb4] sm:$0xff]
        %v272 = vld [vmem:[%s195 + $0xbc] sm:$0xf]
        %v273 = vld [vmem:[%s195 + $0xc0] sm:$0xff]
        %v274 = vld [vmem:[%s195 + $0xc8] sm:$0xf]
        %v275 = vld [vmem:[%s195 + $0xcc] sm:$0xff]
        %v276 = vld [vmem:[%s195 + $0xd4] sm:$0xf]
        %v277 = vld [vmem:[%s195 + $0xd8] sm:$0xff]
        %v278 = vld [vmem:[%s195 + $0xe0] sm:$0xf]
        %v279 = vld [vmem:[%s195 + $0xe4] sm:$0xff]
        %v280 = vld [vmem:[%s195 + $0xec] sm:$0xf]
        %v281 = vld [vmem:[%s195 + $0xf0] sm:$0xff]
        %v282 = vld [vmem:[%s195 + $0xf8] sm:$0xf]
        %v283 = vld [vmem:[%s195 + $0xfc] sm:$0xff]
        %v284 = vld [vmem:[%s195 + $0x104] sm:$0xf]
        %v285 = vld [vmem:[%s195 + $0x108] sm:$0xff]
        %v286 = vld [vmem:[%s195 + $0x110] sm:$0xf]
        %v287 = vld [vmem:[%s195 + $0x114] sm:$0xff]
        %v288 = vld [vmem:[%s195 + $0x11c] sm:$0xf]
        %v289 = vld [vmem:[%s195 + $0x120] sm:$0xff]
        %v290 = vld [vmem:[%s195 + $0x128] sm:$0xf]
        %v291 = vld [vmem:[%s195 + $0x12c] sm:$0xff]
        %v292 = vld [vmem:[%s195 + $0x134] sm:$0xf]
        %v293 = vld [vmem:[%s195 + $0x138] sm:$0xff]
        %v294 = vld [vmem:[%s195 + $0x140] sm:$0xf]
        %v295 = vld [vmem:[%s195 + $0x144] sm:$0xff]
        %v296 = vld [vmem:[%s195 + $0x14c] sm:$0xf]
        %v297 = vld [vmem:[%s195 + $0x150] sm:$0xff]
        %v298 = vld [vmem:[%s195 + $0x158] sm:$0xf]
        %v299 = vld [vmem:[%s195 + $0x15c] sm:$0xff]
        %v300 = vld [vmem:[%s195 + $0x164] sm:$0xf]
        %v301 = vld [vmem:[%s195 + $0x168] sm:$0xff]
        %v302 = vld [vmem:[%s195 + $0x170] sm:$0xf]
        %v303 = vld [vmem:[%s195 + $0x174] sm:$0xff]
        %v304 = vld [vmem:[%s195 + $0x17c] sm:$0xf]
        %v307 = vunpack.c.l.b16 %v239
        %v308 = vunpack.c.h.b16 %v239
        %v309 = vunpack.c.l.b16 %v240
        %v310 = vunpack.c.h.b16 %v240
        %v311 = vpack.c.b16 %v309, %v307
        %v312 = vpack.c.b16 %v310, %v308
        %v379 = vunpack.c.l.b16 %v241
        %v380 = vunpack.c.h.b16 %v241
        %v381 = vunpack.c.l.b16 %v242
        %v382 = vunpack.c.l.b16 %v243
        %v383 = vunpack.c.h.b16 %v243
        %v384 = vunpack.c.l.b16 %v244
        %v385 = vunpack.c.l.b16 %v245
        %v386 = vunpack.c.h.b16 %v245
        %v387 = vunpack.c.l.b16 %v246
        %v388 = vunpack.c.l.b16 %v247
        %v389 = vunpack.c.h.b16 %v247
        %v390 = vunpack.c.l.b16 %v248
        %v391 = vunpack.c.l.b16 %v249
        %v392 = vunpack.c.h.b16 %v249
        %v393 = vunpack.c.l.b16 %v250
        %v394 = vunpack.c.l.b16 %v251
        %v395 = vunpack.c.h.b16 %v251
        %v396 = vunpack.c.l.b16 %v252
        %v397 = vunpack.c.l.b16 %v253
        %v398 = vunpack.c.h.b16 %v253
        %v399 = vunpack.c.l.b16 %v254
        %v400 = vunpack.c.l.b16 %v255
        %v401 = vunpack.c.h.b16 %v255
        %v402 = vunpack.c.l.b16 %v256
        %v403 = vunpack.c.l.b16 %v257
        %v404 = vunpack.c.h.b16 %v257
        %v405 = vunpack.c.l.b16 %v258
        %v406 = vunpack.c.l.b16 %v259
        %v407 = vunpack.c.h.b16 %v259
        %v408 = vunpack.c.l.b16 %v260
        %v409 = vunpack.c.l.b16 %v261
        %v410 = vunpack.c.h.b16 %v261
        %v411 = vunpack.c.l.b16 %v262
        %v412 = vunpack.c.l.b16 %v263
        %v413 = vunpack.c.h.b16 %v263
        %v414 = vunpack.c.l.b16 %v264
        %v415 = vunpack.c.l.b16 %v265
        %v416 = vunpack.c.h.b16 %v265
        %v417 = vunpack.c.l.b16 %v266
        %v418 = vunpack.c.l.b16 %v267
        %v419 = vunpack.c.h.b16 %v267
        %v420 = vunpack.c.l.b16 %v268
        %v421 = vunpack.c.l.b16 %v269
        %v422 = vunpack.c.h.b16 %v269
        %v423 = vunpack.c.l.b16 %v270
        %v424 = vunpack.c.l.b16 %v271
        %v425 = vunpack.c.h.b16 %v271
        %v426 = vunpack.c.l.b16 %v272
        %v427 = vunpack.c.l.b16 %v273
        %v428 = vunpack.c.h.b16 %v273
        %v429 = vunpack.c.l.b16 %v274
        %v430 = vunpack.c.l.b16 %v275
        %v431 = vunpack.c.h.b16 %v275
        %v432 = vunpack.c.l.b16 %v276
        %v433 = vunpack.c.l.b16 %v277
        %v434 = vunpack.c.h.b16 %v277
        %v435 = vunpack.c.l.b16 %v278
        %v436 = vunpack.c.l.b16 %v279
        %v437 = vunpack.c.h.b16 %v279
        %v438 = vunpack.c.l.b16 %v280
        %v439 = vunpack.c.l.b16 %v281
        %v440 = vunpack.c.h.b16 %v281
        %v441 = vunpack.c.l.b16 %v282
        %v442 = vunpack.c.l.b16 %v283
        %v443 = vunpack.c.h.b16 %v283
        %v444 = vunpack.c.l.b16 %v284
        %v445 = vunpack.c.l.b16 %v285
        %v446 = vunpack.c.h.b16 %v285
        %v447 = vunpack.c.l.b16 %v286
        %v448 = vunpack.c.l.b16 %v287
        %v449 = vunpack.c.h.b16 %v287
        %v450 = vunpack.c.l.b16 %v288
        %v451 = vunpack.c.l.b16 %v289
        %v452 = vunpack.c.h.b16 %v289
        %v453 = vunpack.c.l.b16 %v290
        %v454 = vunpack.c.l.b16 %v291
        %v455 = vunpack.c.h.b16 %v291
        %v456 = vunpack.c.l.b16 %v292
        %v457 = vunpack.c.l.b16 %v293
        %v458 = vunpack.c.h.b16 %v293
        %v459 = vunpack.c.l.b16 %v294
        %v460 = vunpack.c.l.b16 %v295
        %v461 = vunpack.c.h.b16 %v295
        %v462 = vunpack.c.l.b16 %v296
        %v463 = vunpack.c.l.b16 %v297
        %v464 = vunpack.c.h.b16 %v297
        %v465 = vunpack.c.l.b16 %v298
        %v466 = vunpack.c.l.b16 %v299
        %v467 = vunpack.c.h.b16 %v299
        %v468 = vunpack.c.l.b16 %v300
        %v469 = vunpack.c.l.b16 %v301
        %v470 = vunpack.c.h.b16 %v301
        %v471 = vunpack.c.l.b16 %v302
        %v472 = vunpack.c.l.b16 %v303
        %v473 = vunpack.c.h.b16 %v303
        %v474 = vunpack.c.l.b16 %v304
        %v475 = vpack.c.b16 %v382, %v379
        %v476 = vpack.c.b16 %v383, %v380
        %v477 = vpack.c.b16 %v384, %v381
        %v478 = vpack.c.b16 %v388, %v385
        %v479 = vpack.c.b16 %v389, %v386
        %v480 = vpack.c.b16 %v390, %v387
        %v481 = vpack.c.b16 %v394, %v391
        %v482 = vpack.c.b16 %v395, %v392
        %v483 = vpack.c.b16 %v396, %v393
        %v484 = vpack.c.b16 %v400, %v397
        %v485 = vpack.c.b16 %v401, %v398
        %v486 = vpack.c.b16 %v402, %v399
        %v487 = vpack.c.b16 %v406, %v403
        %v488 = vpack.c.b16 %v407, %v404
        %v489 = vpack.c.b16 %v408, %v405
        %v490 = vpack.c.b16 %v412, %v409
        %v491 = vpack.c.b16 %v413, %v410
        %v492 = vpack.c.b16 %v414, %v411
        %v493 = vpack.c.b16 %v418, %v415
        %v494 = vpack.c.b16 %v419, %v416
        %v495 = vpack.c.b16 %v420, %v417
        %v496 = vpack.c.b16 %v424, %v421
        %v497 = vpack.c.b16 %v425, %v422
        %v498 = vpack.c.b16 %v426, %v423
        %v499 = vpack.c.b16 %v430, %v427
        %v500 = vpack.c.b16 %v431, %v428
        %v501 = vpack.c.b16 %v432, %v429
        %v502 = vpack.c.b16 %v436, %v433
        %v503 = vpack.c.b16 %v437, %v434
        %v504 = vpack.c.b16 %v438, %v435
        %v505 = vpack.c.b16 %v442, %v439
        %v506 = vpack.c.b16 %v443, %v440
        %v507 = vpack.c.b16 %v444, %v441
        %v508 = vpack.c.b16 %v448, %v445
        %v509 = vpack.c.b16 %v449, %v446
        %v510 = vpack.c.b16 %v450, %v447
        %v511 = vpack.c.b16 %v454, %v451
        %v512 = vpack.c.b16 %v455, %v452
        %v513 = vpack.c.b16 %v456, %v453
        %v514 = vpack.c.b16 %v460, %v457
        %v515 = vpack.c.b16 %v461, %v458
        %v516 = vpack.c.b16 %v462, %v459
        %v517 = vpack.c.b16 %v466, %v463
        %v518 = vpack.c.b16 %v467, %v464
        %v519 = vpack.c.b16 %v468, %v465
        %v520 = vpack.c.b16 %v472, %v469
        %v521 = vpack.c.b16 %v473, %v470
        %v522 = vpack.c.b16 %v474, %v471
        %571 = vmatprep.subr.bf16.mxu0 %v476
        %572 = vmatpush1.bf16.msra.mxu0 %v475
        %573 = vmatprep.subr.bf16.mxu0 %v479
        %574 = vmatpush1.bf16.msra.mxu0 %v478
        %575 = vmatprep.subr.bf16.mxu0 %v482
        %576 = vmatpush1.bf16.msra.mxu0 %v481
        %577 = vmatprep.subr.bf16.mxu0 %v485
        %578 = vmatpush1.bf16.msra.mxu0 %v484
        %579 = vmatprep.subr.bf16.mxu0 %v488
        %580 = vmatpush1.bf16.msra.mxu0 %v487
        %581 = vmatprep.subr.bf16.mxu0 %v491
        %582 = vmatpush1.bf16.msra.mxu0 %v490
        %583 = vmatprep.subr.bf16.mxu0 %v494
        %584 = vmatpush1.bf16.msra.mxu0 %v493
        %585 = vmatprep.subr.bf16.mxu0 %v497
        %586 = vmatpush1.bf16.msra.mxu0 %v496
        %587 = vmatprep.subr.bf16.mxu0 %v500
        %588 = vmatpush1.bf16.msra.mxu0 %v499
        %589 = vmatprep.subr.bf16.mxu0 %v503
        %590 = vmatpush1.bf16.msra.mxu0 %v502
        %591 = vmatprep.subr.bf16.mxu0 %v506
        %592 = vmatpush1.bf16.msra.mxu0 %v505
        %593 = vmatprep.subr.bf16.mxu0 %v509
        %594 = vmatpush1.bf16.msra.mxu0 %v508
        %595 = vmatprep.subr.bf16.mxu0 %v512
        %596 = vmatpush1.bf16.msra.mxu0 %v511
        %597 = vmatprep.subr.bf16.mxu0 %v515
        %598 = vmatpush1.bf16.msra.mxu0 %v514
        %599 = vmatprep.subr.bf16.mxu0 %v518
        %600 = vmatpush1.bf16.msra.mxu0 %v517
        %601 = vmatprep.subr.bf16.mxu0 %v521
        %602 = vmatpush1.bf16.msra.mxu0 %v520
        %603 = vmatprep.mubr.bf16.mxu0 %v312
        %604 = vmatmul.mubr.bf16.gmra.mrb[0].mxu0 %v311
        %v605 = vpop.f32.mrb[0].mxu0
        %v606 = vadd.f32 0.0, %v605
        %v607 = vpop.f32.mrb[0].mxu0
        %v608 = vadd.f32 0.0, %v607
        %v609 = vpop.f32.mrb[0].mxu0
        %v610 = vadd.f32 0.0, %v609
        %v611 = vpop.f32.mrb[0].mxu0
        %v612 = vadd.f32 0.0, %v611
        %613 = vdwg.mxu0
        %614 = vmatprep.subr.bf16.mxu0 0
        %615 = vmatpush1.bf16.msra.mxu0 %v477
        %616 = vmatprep.subr.bf16.mxu0 0
        %617 = vmatpush1.bf16.msra.mxu0 %v480
        %618 = vmatprep.subr.bf16.mxu0 0
        %619 = vmatpush1.bf16.msra.mxu0 %v483
        %620 = vmatprep.subr.bf16.mxu0 0
        %621 = vmatpush1.bf16.msra.mxu0 %v486
        %622 = vmatprep.subr.bf16.mxu0 0
        %623 = vmatpush1.bf16.msra.mxu0 %v489
        %624 = vmatprep.subr.bf16.mxu0 0
        %625 = vmatpush1.bf16.msra.mxu0 %v492
        %626 = vmatprep.subr.bf16.mxu0 0
        %627 = vmatpush1.bf16.msra.mxu0 %v495
        %628 = vmatprep.subr.bf16.mxu0 0
        %629 = vmatpush1.bf16.msra.mxu0 %v498
        %630 = vmatprep.subr.bf16.mxu0 0
        %631 = vmatpush1.bf16.msra.mxu0 %v501
        %632 = vmatprep.subr.bf16.mxu0 0
        %633 = vmatpush1.bf16.msra.mxu0 %v504
        %634 = vmatprep.subr.bf16.mxu0 0
        %635 = vmatpush1.bf16.msra.mxu0 %v507
        %636 = vmatprep.subr.bf16.mxu0 0
        %637 = vmatpush1.bf16.msra.mxu0 %v510
        %638 = vmatprep.subr.bf16.mxu0 0
        %639 = vmatpush1.bf16.msra.mxu0 %v513
        %640 = vmatprep.subr.bf16.mxu0 0
        %641 = vmatpush1.bf16.msra.mxu0 %v516
        %642 = vmatprep.subr.bf16.mxu0 0
        %643 = vmatpush1.bf16.msra.mxu0 %v519
        %644 = vmatprep.subr.bf16.mxu0 0
        %645 = vmatpush1.bf16.msra.mxu0 %v522
        %646 = vmatprep.mubr.bf16.mxu0 %v312
        %647 = vmatmul.mubr.bf16.gmra.mrb[0].mxu0 %v311
        %v648 = vpop.f32.mrb[0].mxu0
        %v649 = vadd.f32 0.0, %v648
        %v650 = vpop.f32.mrb[0].mxu0
        %v651 = vpop.f32.mrb[0].mxu0
        %v652 = vadd.f32 0.0, %v651
        %v653 = vpop.f32.mrb[0].mxu0
        %654 = vdwg.mxu0
        %v655 = vadd.f32 %v233, %v606
        %v656 = vadd.f32 %v234, %v608
        %v657 = vadd.f32 %v235, %v649
        %v658 = vadd.f32 %v236, %v610
        %v659 = vadd.f32 %v237, %v612
        %v660 = vadd.f32 %v238, %v652
        %661 = vst [vmem:[#allocation2] sm:$0xff] %v655
        %662 = vst [vmem:[#allocation2 + $0x8] sm:$0xff] %v656
        %663 = vst [vmem:[#allocation2 + $0x10] sm:$0xff] %v657
        %664 = vst [vmem:[#allocation2 + $0x18] sm:$0xff] %v658
        %665 = vst [vmem:[#allocation2 + $0x20] sm:$0xff] %v659
        %666 = vst [vmem:[#allocation2 + $0x28] sm:$0xff] %v660
        // Predicated region
        $region41: #{tpu_custom_call.1} parent=27 // pred_check
          %p667 = pneg %p223
        $region42: #{tpu_custom_call.1} parent=27 // pred_check_branch
          %669 = sbr.rel (%p667) target = $region44
        $region43: #{tpu_custom_call.1} parent=27 // pred_region
          %v670 = vld [vmem:[#allocation2] sm:$0xff]
          %v671 = vld [vmem:[#allocation2 + $0x8] sm:$0xff]
          %v672 = vld [vmem:[#allocation2 + $0x10] sm:$0xff]
          %v673 = vld [vmem:[#allocation2 + $0x18] sm:$0xff]
          %v674 = vld [vmem:[#allocation2 + $0x20] sm:$0xff]
          %v675 = vld [vmem:[#allocation2 + $0x28] sm:$0xff]
          %v676 = vpack.c.bf16 %v673, %v670
          %v677 = vpack.c.bf16 %v674, %v671
          %v678 = vpack.c.bf16 %v675, %v672
          %v682 = vunpack.c.l.b16 %v676
          %v683 = vunpack.c.l.b16 %v677
          %v684 = vunpack.c.l.b16 %v678
          %v685 = vunpack.c.h.b16 %v676
          %v686 = vunpack.c.h.b16 %v677
          %v687 = vunpack.c.h.b16 %v678
          %v688 = vpack.c.b16 %v683, %v682
          %v689 = vpack.c.b16 %v684, %v684
          %v690 = vpack.c.b16 %v686, %v685
          %v691 = vpack.c.b16 %v687, %v687
          %696 = vst [vmem:[%s215] sm:$0xff] %v688
          %697 = vst [vmem:[%s215 + $0x8] sm:$0xf] %v689
          %698 = vst [vmem:[%s215 + $0xc] sm:$0xff] %v690
          %699 = vst [vmem:[%s215 + $0x14] sm:$0xf] %v691
        $region44: #{tpu_custom_call.1} parent=27 // pred_fallthru
          _
        %s700 = sand.u32 %s105, 1
        %s701 = scalar_lea.sflag [#allocation5], %s700
        %s702 = sand.u32 %s105, 1
        %s703 = smul.addr %s702, 24
        %s704 = scalar_lea.vmem [#allocation8], %s703
        // Predicated region
        $region45: #{tpu_custom_call.1} parent=27 // pred_check
          %p705 = pneg %p115
        $region46: #{tpu_custom_call.1} parent=27 // pred_check_branch
          %707 = sbr.rel (%p705) target = $region48
        $region47: #{tpu_custom_call.1} parent=27 // pred_region
          %s708 = smul.u32 2, %s25
          %s709 = smul.u32 3, %s26
          %s711 = ssub.s32 384, 384
          %712 = vsyncadd %s701, %s711
          %s713 = smul.addr %s708, 6
          %s714 = sadd.s32 %s709, %s713
          %s715 = smul.addr %s714, 64
          %s716 = scalar_lea.hbm %s2, %s715
          %s717 = sshll.u32 %s704, 4
          %s718 = int_to_ptr.vmem [resolvable:$true] %s717
          %723 = dma.vmem_to_hbm [thread:$0]  %s718, 384, %s716, %s701, 192, 384, 12
        $region48: #{tpu_custom_call.1} parent=27 // pred_fallthru
          _
      $region28: #{tpu_custom_call.1} parent=5 // pred_fallthru
        _
      %p724 = scmp.le.s32.totalorder 2, %s15
      // Predicated region
      $region49: #{tpu_custom_call.1} parent=5 // pred_check
        %p725 = pneg %p724
      $region50: #{tpu_custom_call.1} parent=5 // pred_check_branch
        %727 = sbr.rel (%p725) target = $region52
      $region51: #{tpu_custom_call.1} parent=5 // pred_region
        %s728 = ssub.s32 %s15, 2
        // Predicated region
        $region53: #{tpu_custom_call.1} parent=51 // pred_check
          %p729 = pneg %p121
        $region54: #{tpu_custom_call.1} parent=51 // pred_check_branch
          %731 = sbr.rel (%p729) target = $region56
        $region55: #{tpu_custom_call.1} parent=51 // pred_region
          %s732 = sand.u32 %s106, 1
          %s733 = scalar_lea.sflag [#allocation5], %s732
          %s734 = sand.u32 %s106, 1
          %s735 = smul.addr %s734, 24
          %s736 = scalar_lea.vmem [#allocation8], %s735
          %737 = dma.done %s733, 384
        $region56: #{tpu_custom_call.1} parent=51 // pred_fallthru
          _
      $region52: #{tpu_custom_call.1} parent=5 // pred_fallthru
        _
    $region6: #{tpu_custom_call.1} parent=1 // loop_footer
      %s19 = sadd.s32 1, %s15
    $region7: #{tpu_custom_call.1} parent=1 // loop_footer_branch
      %14 = sbr.rel target = $region3
    $region8: #{tpu_custom_call.1} parent=1 // loop_exit
      _
    %738 = vsyncpa [#allocation4], 1
    %s739 = scalar_lea.sflag [#allocation4], 1
    %740 = vsyncpa %s739, 1
    %741 = vsyncpa [#allocation7], 1
    %s742 = scalar_lea.sflag [#allocation7], 1
    %743 = vsyncpa %s742, 1
    %744 = vsyncpa [#allocation5], 1
    %s745 = scalar_lea.sflag [#allocation5], 1
    %746 = vsyncpa %s745, 1

</llo_original>
